<compile_context>
chip_gen: v7x
topology: tpu7x:2x2x1
jax: 0.10.0
libtpu: 0.0.40
codegen_flags: <defaults>
</compile_context>

<pallas_src>
import math

import jax
import jax.numpy as jnp
from jax import lax
from jax.experimental import pallas as pl
from jax.experimental.pallas import tpu as pltpu


# Vocabulary sizes from the PyTorch module.
_MINUTE_SIZE, _HOUR_SIZE, _WEEKDAY_SIZE, _DAY_SIZE, _MONTH_SIZE = 4, 24, 7, 32, 13
# Feature order in x[..., :4] is [month, day, weekday, hour].
_TABLE_SIZES = (_MONTH_SIZE, _DAY_SIZE, _WEEKDAY_SIZE, _HOUR_SIZE)  # 13+32+7+24 = 76
_FUSED_ROWS = 128                                                   # pad 76 -> 128


# ---------------------------------------------------------------------------
# Fixed sinusoidal embedding tables (FixedEmbedding.__init__)
# ---------------------------------------------------------------------------
def fixed_embedding_table(c_in: int, d_model: int) -> jnp.ndarray:
    position = jnp.arange(c_in, dtype=jnp.float32)[:, None]                  # (c_in, 1)
    div_term = jnp.exp(
        jnp.arange(0, d_model, 2, dtype=jnp.float32)
        * -(math.log(10000.0) / d_model)
    )
    sin = jnp.sin(position * div_term)
    cos = jnp.cos(position * div_term[: d_model // 2])
    w = jnp.zeros((c_in, d_model), dtype=jnp.float32)
    w = w.at[:, 0::2].set(sin)
    w = w.at[:, 1::2].set(cos)
    return w


def _offsets():
    off = [0]
    for s in _TABLE_SIZES[:-1]:
        off.append(off[-1] + s)
    return jnp.asarray(off, dtype=jnp.int32)                                 # [0, 13, 45, 52]


def _fused_table(month_tab, day_tab, wday_tab, hour_tab):
    """Concatenate the 4 tables into one (128, d_model) table (zero-padded)."""
    tab = jnp.concatenate([month_tab, day_tab, wday_tab, hour_tab], axis=0)  # (76, d)
    return jnp.pad(tab, ((0, _FUSED_ROWS - tab.shape[0]), (0, 0)))           # (128, d)


def _block_diag_table(fused_tab, g_pack):
    """(G*128, G*d_model) block-diagonal table for lane-dense packed output."""
    d = fused_tab.shape[1]
    bd = jnp.zeros((g_pack * _FUSED_ROWS, g_pack * d), fused_tab.dtype)
    for g in range(g_pack):
        bd = bd.at[g * _FUSED_ROWS:(g + 1) * _FUSED_ROWS,
                   g * d:(g + 1) * d].set(fused_tab)
    return bd


# ---------------------------------------------------------------------------
# Pallas kernel: single fused multi-hot @ table MXU matmul per tile
# ---------------------------------------------------------------------------
def temporal_embed_kernel(idx_ref, tab_ref, out_ref):
    idx = idx_ref[...]                       # (tile, 4*G) int32, offsets folded in
    tab = tab_ref[...]                       # (G*128, W)
    rows = idx.shape[0]
    g_pack = idx.shape[1] // 4               # static -> Python loop unrolls

    lanes = lax.broadcasted_iota(jnp.int32, (rows, _FUSED_ROWS), 1)  # (tile, 128)
    segs = []
    for g in range(g_pack):
        j = 4 * g
        # Exactly 4 ones per logical row; the 4 index ranges are disjoint.
        hit = ((idx[:, j + 0:j + 1] == lanes)
               | (idx[:, j + 1:j + 2] == lanes)
               | (idx[:, j + 2:j + 3] == lanes)
               | (idx[:, j + 3:j + 4] == lanes))
        segs.append(hit.astype(tab.dtype))
    # Segments are 128-lane (vreg-aligned) slabs: the concat is pure layout.
    hot = segs[0] if g_pack == 1 else jnp.concatenate(segs, axis=1)  # (tile, G*128)

    out = jnp.dot(hot, tab, preferred_element_type=jnp.float32)      # (tile, W)
    out_ref[...] = out.astype(out_ref.dtype)


# ---------------------------------------------------------------------------
# Wrapper
# ---------------------------------------------------------------------------
def _round_up(x: int, m: int) -> int:
    return ((x + m - 1) // m) * m


def _sublane(dtype) -> int:
    # Native sublane packing: f32 -> 8, bf16 -> 16, 8-bit -> 32.
    return max(8, 32 // jnp.dtype(dtype).itemsize)


def _budget_tile_rows(out_width: int) -> int:
    # ~12 MiB per buffered set (out block sized as f32 + lane-padded int32 idx
    # block); x2 for double-buffering plus the resident table stays under the
    # 32 MiB scoped VMEM we request below (safe on v7x's 64 MiB physical VMEM,
    # and big enough that d_model >= 1024 still gets >= 512-row tiles).
    lane_cols = max(_round_up(out_width, 128), 128)
    bytes_per_row = (lane_cols + 128) * 4
    cap = (12 * 1024 * 1024) // bytes_per_row
    cap = max(256, (cap // 256) * 256)
    return min(2048, cap)


def temporal_embedding(x, month_tab, day_tab, wday_tab, hour_tab, *,
                       tile=None, out_dtype=jnp.float32, mxu_dtype=jnp.float32):
    """x: [B, L, F] int array (F >= 4), features [month, day, weekday, hour, ...].

    Returns [B, L, d_model] in `out_dtype`.  float32 (default) matches the
    PyTorch reference; bfloat16 roughly halves the dominant HBM write traffic
    (recommended on v5e/v6e when the consumer tolerates it).
    `mxu_dtype=jnp.bfloat16` additionally feeds the MXU natively (v6e/v7x) at
    the cost of ~3-decimal-digit table rounding.
    """
    # TODO(synk): freq='t' minute path omitted (module default is freq='h');
    # it would just be a 5th table + offset in the fused lookup.
    B, L, _ = x.shape
    d_model = month_tab.shape[1]
    N = B * L

    # Lane-dense packing factor: G logical time-steps per 128-lane output row.
    g_pack = 1
    if 8 <= d_model < 128 and 128 % d_model == 0 and N % (128 // d_model) == 0:
        g_pack = 128 // d_model
    out_width = g_pack * d_model             # 128 when packed, d_model otherwise
    n_p = N // g_pack                        # kernel-visible output rows
    k_rows = g_pack * _FUSED_ROWS

    fused = _fused_table(month_tab, day_tab, wday_tab, hour_tab).astype(mxu_dtype)
    tab = fused if g_pack == 1 else _block_diag_table(fused, g_pack)

    # Fold per-feature row offsets into the indices wrapper-side (kernel does
    # zero index math), then pack G consecutive time-steps per row.
    # (Out-of-range marks silently hit a wrong/zero row instead of erroring
    # like torch.nn.Embedding.)
    idx = x[..., :4].reshape(N, 4).astype(jnp.int32) + _offsets()[None, :]
    idx = idx.reshape(n_p, 4 * g_pack)

    sub = _sublane(out_dtype)
    if tile is None:
        tile_p = _budget_tile_rows(out_width)
        # Keep >= 2 grid steps when there is enough work so the ("parallel",)
        # axis gives both v7x TensorCores something to do.
        tile_p = min(tile_p, _round_up(pl.cdiv(n_p, 2), 256))
    else:
        tile_p = _round_up(max(int(tile) // g_pack, 1), sub)
    # Never let the block exceed the (sublane-rounded-down) row count; the
    # ragged last block is then handled by Pallas' clipped reads/masked writes.
    tile_p = min(tile_p, max(sub, (n_p // sub) * sub))
    tile_p = max(sub, tile_p)

    # Only when the whole input is smaller than one sublane tile do we pad a
    # handful (< 32) of rows; the old full-size pad + out[:N] copy is gone.
    n_rows = max(n_p, tile_p)
    if n_rows != n_p:
        idx = jnp.pad(idx, ((0, n_rows - n_p), (0, 0)))

    grid = (pl.cdiv(n_rows, tile_p),)

    def _run(table_spec):
        return pl.pallas_call(
            temporal_embed_kernel,
            out_shape=jax.ShapeDtypeStruct((n_rows, out_width), out_dtype),
            grid_spec=pltpu.PrefetchScalarGridSpec(
                num_scalar_prefetch=0,
                grid=grid,
                in_specs=[
                    pl.BlockSpec((tile_p, 4 * g_pack), lambda i: (i, 0)),  # idx (VMEM)
                    table_spec,                                            # fused table
                ],
                out_specs=pl.BlockSpec((tile_p, out_width), lambda i: (i, 0)),
            ),
            compiler_params=pltpu.CompilerParams(
                dimension_semantics=("parallel",),
                vmem_limit_bytes=32 * 1024 * 1024,
            ),
        )(idx, tab)

    # The fused table block is grid-invariant; single-buffering it frees its
    # second VMEM copy for larger row tiles.  Fall back to the default
    # double-buffered spec if this Pallas build rejects Buffered(1).
    try:
        out = _run(pl.BlockSpec((k_rows, out_width), lambda i: (0, 0),
                                pipeline_mode=pl.Buffered(1)))
    except Exception:
        out = _run(pl.BlockSpec((k_rows, out_width), lambda i: (0, 0)))

    if n_rows != n_p:
        out = out[:n_p]
    return out.reshape(B, L, d_model)


# ---------------------------------------------------------------------------
# Demo / self-check
# ---------------------------------------------------------------------------
def _reference(x, month_tab, day_tab, wday_tab, hour_tab):
    return (jnp.take(hour_tab, x[:, :, 3], axis=0)
            + jnp.take(wday_tab, x[:, :, 2], axis=0)
            + jnp.take(day_tab, x[:, :, 1], axis=0)
            + jnp.take(month_tab, x[:, :, 0], axis=0))


def _make_marks(key, B, L):
    ks = jax.random.split(key, 5)
    return jnp.stack(
        [jax.random.randint(ks[0], (B, L), 0, _MONTH_SIZE),
         jax.random.randint(ks[1], (B, L), 0, _DAY_SIZE),
         jax.random.randint(ks[2], (B, L), 0, _WEEKDAY_SIZE),
         jax.random.randint(ks[3], (B, L), 0, _HOUR_SIZE),
         jax.random.randint(ks[4], (B, L), 0, _MINUTE_SIZE)],
        axis=-1).astype(jnp.int32)                           # [B, L, 5]


def _make_tables(d_model):
    return (fixed_embedding_table(_MONTH_SIZE, d_model),
            fixed_embedding_table(_DAY_SIZE, d_model),
            fixed_embedding_table(_WEEKDAY_SIZE, d_model),
            fixed_embedding_table(_HOUR_SIZE, d_model))


if __name__ == "__main__":
    key = jax.random.PRNGKey(0)
    k1, k2, k3 = jax.random.split(key, 3)

    # Case 1: small module-like shape; lane-dense packed path (G = 4), f32.
    B, L, d_model = 2, 8, 32
    tabs = _make_tables(d_model)
    x = _make_marks(k1, B, L)
    out = jax.block_until_ready(temporal_embedding(x, *tabs))
    ref = _reference(x, *tabs)
    assert out.shape == (B, L, d_model)
    assert jnp.allclose(out, ref, atol=1e-5, rtol=1e-5)

    # Case 2: non-tile-multiple rows -> ragged last block (packed, G = 2), f32.
    B, L, d_model = 2, 37, 64
    tabs = _make_tables(d_model)
    x = _make_marks(k2, B, L)
    out = jax.block_until_ready(temporal_embedding(x, *tabs))
    ref = _reference(x, *tabs)
    assert out.shape == (B, L, d_model)
    assert jnp.allclose(out, ref, atol=1e-5, rtol=1e-5)

    # Case 3: d_model = 128, ragged grid, bf16 output + bf16 MXU feed.
    B, L, d_model = 2, 61, 128
    tabs = _make_tables(d_model)
    x = _make_marks(k3, B, L)
    out = jax.block_until_ready(
        temporal_embedding(x, *tabs, out_dtype=jnp.bfloat16,
                           mxu_dtype=jnp.bfloat16))
    ref = _reference(x, *tabs)
    assert out.shape == (B, L, d_model)
    assert out.dtype == jnp.bfloat16
    assert jnp.allclose(out.astype(jnp.float32), ref, atol=8e-2, rtol=5e-2)

    print("KERNEL_OK")
</pallas_src>

<mosaic_0001>
module attributes {stable_mosaic.version = 11 : i64} {
  func.func @temporal_embed_kernel(%arg0: i32, %arg1: memref<8x16xi32, #tpu.memory_space<vmem>>, %arg2: memref<512x128xf32, #tpu.memory_space<vmem>>, %arg3: memref<8x128xf32, #tpu.memory_space<vmem>>) attributes {dimension_semantics = [#tpu.dimension_semantics<parallel>], iteration_bounds = array<i64: 1>, scalar_prefetch = 0 : i64, scratch_operands = 0 : i64, tpu.core_type = #tpu.core_type<tc>, window_params = [{transform_indices = @transform_0, window_bounds = array<i64: 8, 16>}, {pipeline_mode = #tpu.pipeline_mode<synchronous>, transform_indices = @transform_1, window_bounds = array<i64: 512, 128>}, {transform_indices = @transform_2, window_bounds = array<i64: 8, 128>}]} {
    %c0 = arith.constant 0 : index
    %c0_0 = arith.constant 0 : index
    %0 = vector.load %arg1[%c0, %c0_0] : memref<8x16xi32, #tpu.memory_space<vmem>>, vector<8x16xi32>
    %c0_1 = arith.constant 0 : index
    %c0_2 = arith.constant 0 : index
    %1 = vector.load %arg2[%c0_1, %c0_2] : memref<512x128xf32, #tpu.memory_space<vmem>>, vector<512x128xf32>
    %2 = tpu.iota {dimensions = array<i32: 1>} : vector<8x128xi32>
    %3 = vector.extract_strided_slice %0 {offsets = [0, 0], sizes = [8, 1], strides = [1, 1]} : vector<8x16xi32> to vector<8x1xi32>
    %4 = vector.broadcast %3 : vector<8x1xi32> to vector<8x128xi32>
    %5 = arith.cmpi eq, %4, %2 : vector<8x128xi32>
    %6 = vector.extract_strided_slice %0 {offsets = [0, 1], sizes = [8, 1], strides = [1, 1]} : vector<8x16xi32> to vector<8x1xi32>
    %7 = vector.broadcast %6 : vector<8x1xi32> to vector<8x128xi32>
    %8 = arith.cmpi eq, %7, %2 : vector<8x128xi32>
    %9 = arith.ori %5, %8 : vector<8x128xi1>
    %10 = vector.extract_strided_slice %0 {offsets = [0, 2], sizes = [8, 1], strides = [1, 1]} : vector<8x16xi32> to vector<8x1xi32>
    %11 = vector.broadcast %10 : vector<8x1xi32> to vector<8x128xi32>
    %12 = arith.cmpi eq, %11, %2 : vector<8x128xi32>
    %13 = arith.ori %9, %12 : vector<8x128xi1>
    %14 = vector.extract_strided_slice %0 {offsets = [0, 3], sizes = [8, 1], strides = [1, 1]} : vector<8x16xi32> to vector<8x1xi32>
    %15 = vector.broadcast %14 : vector<8x1xi32> to vector<8x128xi32>
    %16 = arith.cmpi eq, %15, %2 : vector<8x128xi32>
    %17 = arith.ori %13, %16 : vector<8x128xi1>
    %18 = arith.extui %17 : vector<8x128xi1> to vector<8x128xi32>
    %19 = arith.sitofp %18 : vector<8x128xi32> to vector<8x128xf32>
    %20 = vector.extract_strided_slice %0 {offsets = [0, 4], sizes = [8, 1], strides = [1, 1]} : vector<8x16xi32> to vector<8x1xi32>
    %21 = vector.broadcast %20 : vector<8x1xi32> to vector<8x128xi32>
    %22 = arith.cmpi eq, %21, %2 : vector<8x128xi32>
    %23 = vector.extract_strided_slice %0 {offsets = [0, 5], sizes = [8, 1], strides = [1, 1]} : vector<8x16xi32> to vector<8x1xi32>
    %24 = vector.broadcast %23 : vector<8x1xi32> to vector<8x128xi32>
    %25 = arith.cmpi eq, %24, %2 : vector<8x128xi32>
    %26 = arith.ori %22, %25 : vector<8x128xi1>
    %27 = vector.extract_strided_slice %0 {offsets = [0, 6], sizes = [8, 1], strides = [1, 1]} : vector<8x16xi32> to vector<8x1xi32>
    %28 = vector.broadcast %27 : vector<8x1xi32> to vector<8x128xi32>
    %29 = arith.cmpi eq, %28, %2 : vector<8x128xi32>
    %30 = arith.ori %26, %29 : vector<8x128xi1>
    %31 = vector.extract_strided_slice %0 {offsets = [0, 7], sizes = [8, 1], strides = [1, 1]} : vector<8x16xi32> to vector<8x1xi32>
    %32 = vector.broadcast %31 : vector<8x1xi32> to vector<8x128xi32>
    %33 = arith.cmpi eq, %32, %2 : vector<8x128xi32>
    %34 = arith.ori %30, %33 : vector<8x128xi1>
    %35 = arith.extui %34 : vector<8x128xi1> to vector<8x128xi32>
    %36 = arith.sitofp %35 : vector<8x128xi32> to vector<8x128xf32>
    %37 = vector.extract_strided_slice %0 {offsets = [0, 8], sizes = [8, 1], strides = [1, 1]} : vector<8x16xi32> to vector<8x1xi32>
    %38 = vector.broadcast %37 : vector<8x1xi32> to vector<8x128xi32>
    %39 = arith.cmpi eq, %38, %2 : vector<8x128xi32>
    %40 = vector.extract_strided_slice %0 {offsets = [0, 9], sizes = [8, 1], strides = [1, 1]} : vector<8x16xi32> to vector<8x1xi32>
    %41 = vector.broadcast %40 : vector<8x1xi32> to vector<8x128xi32>
    %42 = arith.cmpi eq, %41, %2 : vector<8x128xi32>
    %43 = arith.ori %39, %42 : vector<8x128xi1>
    %44 = vector.extract_strided_slice %0 {offsets = [0, 10], sizes = [8, 1], strides = [1, 1]} : vector<8x16xi32> to vector<8x1xi32>
    %45 = vector.broadcast %44 : vector<8x1xi32> to vector<8x128xi32>
    %46 = arith.cmpi eq, %45, %2 : vector<8x128xi32>
    %47 = arith.ori %43, %46 : vector<8x128xi1>
    %48 = vector.extract_strided_slice %0 {offsets = [0, 11], sizes = [8, 1], strides = [1, 1]} : vector<8x16xi32> to vector<8x1xi32>
    %49 = vector.broadcast %48 : vector<8x1xi32> to vector<8x128xi32>
    %50 = arith.cmpi eq, %49, %2 : vector<8x128xi32>
    %51 = arith.ori %47, %50 : vector<8x128xi1>
    %52 = arith.extui %51 : vector<8x128xi1> to vector<8x128xi32>
    %53 = arith.sitofp %52 : vector<8x128xi32> to vector<8x128xf32>
    %54 = vector.extract_strided_slice %0 {offsets = [0, 12], sizes = [8, 1], strides = [1, 1]} : vector<8x16xi32> to vector<8x1xi32>
    %55 = vector.broadcast %54 : vector<8x1xi32> to vector<8x128xi32>
    %56 = arith.cmpi eq, %55, %2 : vector<8x128xi32>
    %57 = vector.extract_strided_slice %0 {offsets = [0, 13], sizes = [8, 1], strides = [1, 1]} : vector<8x16xi32> to vector<8x1xi32>
    %58 = vector.broadcast %57 : vector<8x1xi32> to vector<8x128xi32>
    %59 = arith.cmpi eq, %58, %2 : vector<8x128xi32>
    %60 = arith.ori %56, %59 : vector<8x128xi1>
    %61 = vector.extract_strided_slice %0 {offsets = [0, 14], sizes = [8, 1], strides = [1, 1]} : vector<8x16xi32> to vector<8x1xi32>
    %62 = vector.broadcast %61 : vector<8x1xi32> to vector<8x128xi32>
    %63 = arith.cmpi eq, %62, %2 : vector<8x128xi32>
    %64 = arith.ori %60, %63 : vector<8x128xi1>
    %65 = vector.extract_strided_slice %0 {offsets = [0, 15], sizes = [8, 1], strides = [1, 1]} : vector<8x16xi32> to vector<8x1xi32>
    %66 = vector.broadcast %65 : vector<8x1xi32> to vector<8x128xi32>
    %67 = arith.cmpi eq, %66, %2 : vector<8x128xi32>
    %68 = arith.ori %64, %67 : vector<8x128xi1>
    %69 = arith.extui %68 : vector<8x128xi1> to vector<8x128xi32>
    %70 = arith.sitofp %69 : vector<8x128xi32> to vector<8x128xf32>
    %71 = tpu.concatenate %19, %36, %53, %70 in 1 : vector<8x128xf32>, vector<8x128xf32>, vector<8x128xf32>, vector<8x128xf32> -> vector<8x512xf32>
    %cst = arith.constant dense<0.000000e+00> : vector<8x128xf32>
    %72 = tpu.matmul %71, %1, %cst {dimension_numbers = #tpu.dot_dimension_numbers<[1], [0], [0], [1], [0, 0, 1, 1], [], []>} : vector<8x512xf32>, vector<512x128xf32>, vector<8x128xf32> -> vector<8x128xf32>
    %c0_3 = arith.constant 0 : index
    %c0_4 = arith.constant 0 : index
    %73 = vector.load %arg3[%c0_3, %c0_4] : memref<8x128xf32, #tpu.memory_space<vmem>>, vector<8x128xf32>
    tpu.vector_store %arg3[%c0_3, %c0_4], %72 {strides = array<i32>} : memref<8x128xf32, #tpu.memory_space<vmem>>, vector<8x128xf32>,
    return
  }
  func.func @transform_0(%arg0: i32) -> (i32, i32) {
    %c0_i32 = arith.constant 0 : i32
    %c0_i32_0 = arith.constant 0 : i32
    return %arg0, %c0_i32 : i32, i32
  }
  func.func @transform_1(%arg0: i32) -> (i32, i32) {
    %c0_i32 = arith.constant 0 : i32
    %c0_i32_0 = arith.constant 0 : i32
    %c0_i32_1 = arith.constant 0 : i32
    return %c0_i32, %c0_i32_0 : i32, i32
  }
  func.func @transform_2(%arg0: i32) -> (i32, i32) {
    %c0_i32 = arith.constant 0 : i32
    %c0_i32_0 = arith.constant 0 : i32
    return %arg0, %c0_i32 : i32, i32
  }
}

module attributes {stable_mosaic.version = 11 : i64} {
  func.func @temporal_embed_kernel(%arg0: i32, %arg1: memref<8x16xi32, #tpu.memory_space<vmem>>, %arg2: memref<512x128xf32, #tpu.memory_space<vmem>>, %arg3: memref<8x128xf32, #tpu.memory_space<vmem>>) attributes {dimension_semantics = [#tpu.dimension_semantics<parallel>], iteration_bounds = array<i64: 1>, scalar_prefetch = 0 : i64, scratch_operands = 0 : i64, tpu.core_type = #tpu.core_type<tc>, window_params = [{transform_indices = @transform_0, window_bounds = array<i64: 8, 16>}, {pipeline_mode = #tpu.pipeline_mode<synchronous>, transform_indices = @transform_1, window_bounds = array<i64: 512, 128>}, {transform_indices = @transform_2, window_bounds = array<i64: 8, 128>}]} {
    %c0 = arith.constant 0 : index
    %c0_0 = arith.constant 0 : index
    %0 = vector.load %arg1[%c0, %c0_0] : memref<8x16xi32, #tpu.memory_space<vmem>>, vector<8x16xi32>
    %c0_1 = arith.constant 0 : index
    %c0_2 = arith.constant 0 : index
    %1 = vector.load %arg2[%c0_1, %c0_2] : memref<512x128xf32, #tpu.memory_space<vmem>>, vector<512x128xf32>
    %2 = tpu.iota {dimensions = array<i32: 1>} : vector<8x128xi32>
    %3 = vector.extract_strided_slice %0 {offsets = [0, 0], sizes = [8, 1], strides = [1, 1]} : vector<8x16xi32> to vector<8x1xi32>
    %4 = vector.broadcast %3 : vector<8x1xi32> to vector<8x128xi32>
    %5 = arith.cmpi eq, %4, %2 : vector<8x128xi32>
    %6 = vector.extract_strided_slice %0 {offsets = [0, 1], sizes = [8, 1], strides = [1, 1]} : vector<8x16xi32> to vector<8x1xi32>
    %7 = vector.broadcast %6 : vector<8x1xi32> to vector<8x128xi32>
    %8 = arith.cmpi eq, %7, %2 : vector<8x128xi32>
    %9 = arith.ori %5, %8 : vector<8x128xi1>
    %10 = vector.extract_strided_slice %0 {offsets = [0, 2], sizes = [8, 1], strides = [1, 1]} : vector<8x16xi32> to vector<8x1xi32>
    %11 = vector.broadcast %10 : vector<8x1xi32> to vector<8x128xi32>
    %12 = arith.cmpi eq, %11, %2 : vector<8x128xi32>
    %13 = arith.ori %9, %12 : vector<8x128xi1>
    %14 = vector.extract_strided_slice %0 {offsets = [0, 3], sizes = [8, 1], strides = [1, 1]} : vector<8x16xi32> to vector<8x1xi32>
    %15 = vector.broadcast %14 : vector<8x1xi32> to vector<8x128xi32>
    %16 = arith.cmpi eq, %15, %2 : vector<8x128xi32>
    %17 = arith.ori %13, %16 : vector<8x128xi1>
    %18 = arith.extui %17 : vector<8x128xi1> to vector<8x128xi32>
    %19 = arith.sitofp %18 : vector<8x128xi32> to vector<8x128xf32>
    %20 = vector.extract_strided_slice %0 {offsets = [0, 4], sizes = [8, 1], strides = [1, 1]} : vector<8x16xi32> to vector<8x1xi32>
    %21 = vector.broadcast %20 : vector<8x1xi32> to vector<8x128xi32>
    %22 = arith.cmpi eq, %21, %2 : vector<8x128xi32>
    %23 = vector.extract_strided_slice %0 {offsets = [0, 5], sizes = [8, 1], strides = [1, 1]} : vector<8x16xi32> to vector<8x1xi32>
    %24 = vector.broadcast %23 : vector<8x1xi32> to vector<8x128xi32>
    %25 = arith.cmpi eq, %24, %2 : vector<8x128xi32>
    %26 = arith.ori %22, %25 : vector<8x128xi1>
    %27 = vector.extract_strided_slice %0 {offsets = [0, 6], sizes = [8, 1], strides = [1, 1]} : vector<8x16xi32> to vector<8x1xi32>
    %28 = vector.broadcast %27 : vector<8x1xi32> to vector<8x128xi32>
    %29 = arith.cmpi eq, %28, %2 : vector<8x128xi32>
    %30 = arith.ori %26, %29 : vector<8x128xi1>
    %31 = vector.extract_strided_slice %0 {offsets = [0, 7], sizes = [8, 1], strides = [1, 1]} : vector<8x16xi32> to vector<8x1xi32>
    %32 = vector.broadcast %31 : vector<8x1xi32> to vector<8x128xi32>
    %33 = arith.cmpi eq, %32, %2 : vector<8x128xi32>
    %34 = arith.ori %30, %33 : vector<8x128xi1>
    %35 = arith.extui %34 : vector<8x128xi1> to vector<8x128xi32>
    %36 = arith.sitofp %35 : vector<8x128xi32> to vector<8x128xf32>
    %37 = vector.extract_strided_slice %0 {offsets = [0, 8], sizes = [8, 1], strides = [1, 1]} : vector<8x16xi32> to vector<8x1xi32>
    %38 = vector.broadcast %37 : vector<8x1xi32> to vector<8x128xi32>
    %39 = arith.cmpi eq, %38, %2 : vector<8x128xi32>
    %40 = vector.extract_strided_slice %0 {offsets = [0, 9], sizes = [8, 1], strides = [1, 1]} : vector<8x16xi32> to vector<8x1xi32>
    %41 = vector.broadcast %40 : vector<8x1xi32> to vector<8x128xi32>
    %42 = arith.cmpi eq, %41, %2 : vector<8x128xi32>
    %43 = arith.ori %39, %42 : vector<8x128xi1>
    %44 = vector.extract_strided_slice %0 {offsets = [0, 10], sizes = [8, 1], strides = [1, 1]} : vector<8x16xi32> to vector<8x1xi32>
    %45 = vector.broadcast %44 : vector<8x1xi32> to vector<8x128xi32>
    %46 = arith.cmpi eq, %45, %2 : vector<8x128xi32>
    %47 = arith.ori %43, %46 : vector<8x128xi1>
    %48 = vector.extract_strided_slice %0 {offsets = [0, 11], sizes = [8, 1], strides = [1, 1]} : vector<8x16xi32> to vector<8x1xi32>
    %49 = vector.broadcast %48 : vector<8x1xi32> to vector<8x128xi32>
    %50 = arith.cmpi eq, %49, %2 : vector<8x128xi32>
    %51 = arith.ori %47, %50 : vector<8x128xi1>
    %52 = arith.extui %51 : vector<8x128xi1> to vector<8x128xi32>
    %53 = arith.sitofp %52 : vector<8x128xi32> to vector<8x128xf32>
    %54 = vector.extract_strided_slice %0 {offsets = [0, 12], sizes = [8, 1], strides = [1, 1]} : vector<8x16xi32> to vector<8x1xi32>
    %55 = vector.broadcast %54 : vector<8x1xi32> to vector<8x128xi32>
    %56 = arith.cmpi eq, %55, %2 : vector<8x128xi32>
    %57 = vector.extract_strided_slice %0 {offsets = [0, 13], sizes = [8, 1], strides = [1, 1]} : vector<8x16xi32> to vector<8x1xi32>
    %58 = vector.broadcast %57 : vector<8x1xi32> to vector<8x128xi32>
    %59 = arith.cmpi eq, %58, %2 : vector<8x128xi32>
    %60 = arith.ori %56, %59 : vector<8x128xi1>
    %61 = vector.extract_strided_slice %0 {offsets = [0, 14], sizes = [8, 1], strides = [1, 1]} : vector<8x16xi32> to vector<8x1xi32>
    %62 = vector.broadcast %61 : vector<8x1xi32> to vector<8x128xi32>
    %63 = arith.cmpi eq, %62, %2 : vector<8x128xi32>
    %64 = arith.ori %60, %63 : vector<8x128xi1>
    %65 = vector.extract_strided_slice %0 {offsets = [0, 15], sizes = [8, 1], strides = [1, 1]} : vector<8x16xi32> to vector<8x1xi32>
    %66 = vector.broadcast %65 : vector<8x1xi32> to vector<8x128xi32>
    %67 = arith.cmpi eq, %66, %2 : vector<8x128xi32>
    %68 = arith.ori %64, %67 : vector<8x128xi1>
    %69 = arith.extui %68 : vector<8x128xi1> to vector<8x128xi32>
    %70 = arith.sitofp %69 : vector<8x128xi32> to vector<8x128xf32>
    %71 = tpu.concatenate %19, %36, %53, %70 in 1 : vector<8x128xf32>, vector<8x128xf32>, vector<8x128xf32>, vector<8x128xf32> -> vector<8x512xf32>
    %cst = arith.constant dense<0.000000e+00> : vector<8x128xf32>
    %72 = tpu.matmul %71, %1, %cst {dimension_numbers = #tpu.dot_dimension_numbers<[1], [0], [0], [1], [0, 0, 1, 1], [], []>} : vector<8x512xf32>, vector<512x128xf32>, vector<8x128xf32> -> vector<8x128xf32>
    %c0_3 = arith.constant 0 : index
    %c0_4 = arith.constant 0 : index
    %73 = vector.load %arg3[%c0_3, %c0_4] : memref<8x128xf32, #tpu.memory_space<vmem>>, vector<8x128xf32>
    tpu.vector_store %arg3[%c0_3, %c0_4], %72 {strides = array<i32>} : memref<8x128xf32, #tpu.memory_space<vmem>>, vector<8x128xf32>,
    return
  }
  func.func @transform_0(%arg0: i32) -> (i32, i32) {
    %c0_i32 = arith.constant 0 : i32
    %c0_i32_0 = arith.constant 0 : i32
    return %arg0, %c0_i32 : i32, i32
  }
  func.func @transform_1(%arg0: i32) -> (i32, i32) {
    %c0_i32 = arith.constant 0 : i32
    %c0_i32_0 = arith.constant 0 : i32
    %c0_i32_1 = arith.constant 0 : i32
    return %c0_i32, %c0_i32_0 : i32, i32
  }
  func.func @transform_2(%arg0: i32) -> (i32, i32) {
    %c0_i32 = arith.constant 0 : i32
    %c0_i32_0 = arith.constant 0 : i32
    return %arg0, %c0_i32 : i32, i32
  }
}

</mosaic_0001>

<llo_original>
// kernel: tpu_custom_call.1
$region0: #{tpu_custom_call.1}
  #allocation0 [shape = 'u32[]', space=smem, size = 0x4, offset = 0x4, fixed_abs, tag = 'smem constant byte address 0x4 - core index']
  #allocation1 [shape = 'u32[144,128]{1,0:T(1,128)}', space=vmem, size = 0x12000, scoped, tag = 'internal scratch']
  %s0 = inlined_call_operand.hbm [shape: s32[8,16], index: 0, kind: input, shape index: {}]
  %s1 = inlined_call_operand.hbm [shape: f32[512,128], index: 1, kind: input, shape index: {}]
  %s2 = inlined_call_operand.hbm [shape: f32[8,128], index: 2, kind: output, shape index: {}]
  %s3 = sld [smem:[#allocation0]]
  $region26: #{tpu_custom_call.1} parent=0
    _
  %s5 = ssub.s32 1, %s3
  %s6 = scalar_select 0, %s5, %s3
  $region1: #{tpu_custom_call.1} parent=0
    #allocation2 [shape = 'u8[4096]{0}', space=vmem, size = 0x1000, scoped, tag = 'input window, operand 0, single buffered']
    #allocation3 [shape = 's32[1]{0}', space=sflag, size = 0x4, scoped, tag = 'scoped memory for tpu_custom_call.1']
    #allocation4 [shape = 's32[1]{0}', space=sflag, size = 0x4, scoped, tag = 'scoped memory for tpu_custom_call.1']
    #allocation5 [shape = 'u8[262144]{0}', space=vmem, size = 0x40000, scoped, tag = 'input window, operand 1, single buffered']
    #allocation6 [shape = 's32[1]{0}', space=sflag, size = 0x4, scoped, tag = 'scoped memory for tpu_custom_call.1']
    #allocation7 [shape = 'u8[4096]{0}', space=vmem, size = 0x1000, scoped, tag = 'output window, operand 0, single buffered']
    %7 = vsyncpa [#allocation3], 0
    %8 = vsyncpa [#allocation6], 0
    %9 = vsyncpa [#allocation4], 0
    // Predicated region
    $region2: #{tpu_custom_call.1} parent=1 // pred_check
      _
    $region3: #{tpu_custom_call.1} parent=1 // pred_check_branch
      %11 = sbr.rel (0) target = $region5
    $region4: #{tpu_custom_call.1} parent=1 // pred_region
      %s13 = ssub.s32 128, 128
      %14 = vsyncadd [#allocation3], %s13
      %s16 = sshll.u32 [#allocation2], 4
      %s17 = int_to_ptr.vmem [resolvable:$true] %s16
      %19 = dma.hbm_to_vmem [thread:$0]  %s0, 128, %s17, [#allocation3]
    $region5: #{tpu_custom_call.1} parent=1 // pred_fallthru
      _
    // Predicated region
    $region6: #{tpu_custom_call.1} parent=1 // pred_check
      _
    $region7: #{tpu_custom_call.1} parent=1 // pred_check_branch
      %21 = sbr.rel (0) target = $region9
    $region8: #{tpu_custom_call.1} parent=1 // pred_region
      %s23 = ssub.s32 8192, 8192
      %24 = vsyncadd [#allocation6], %s23
      %s25 = sshll.u32 [#allocation5], 4
      %s26 = int_to_ptr.vmem [resolvable:$true] %s25
      %31 = dma.hbm_to_vmem [thread:$0]  %s1, 8192, %s26, [#allocation6], 128, 128, 8
    $region9: #{tpu_custom_call.1} parent=1 // pred_fallthru
      _
    // Predicated region
    $region10: #{tpu_custom_call.1} parent=1 // pred_check
      _
    $region11: #{tpu_custom_call.1} parent=1 // pred_check_branch
      %33 = sbr.rel (0) target = $region13
    $region12: #{tpu_custom_call.1} parent=1 // pred_region
      %34 = dma.done [#allocation3], 128
    $region13: #{tpu_custom_call.1} parent=1 // pred_fallthru
      _
    // Predicated region
    $region14: #{tpu_custom_call.1} parent=1 // pred_check
      _
    $region15: #{tpu_custom_call.1} parent=1 // pred_check_branch
      %36 = sbr.rel (0) target = $region17
    $region16: #{tpu_custom_call.1} parent=1 // pred_region
      %37 = dma.done [#allocation6], 8192
    $region17: #{tpu_custom_call.1} parent=1 // pred_fallthru
      _
    %v38 = vld [vmem:[#allocation2] sm:$0xff]
    %v39 = vld [vmem:[#allocation5] sm:$0xff]
    %v40 = vld [vmem:[#allocation5 + $0x8] sm:$0xff]
    %v41 = vld [vmem:[#allocation5 + $0x10] sm:$0xff]
    %v42 = vld [vmem:[#allocation5 + $0x18] sm:$0xff]
    %v43 = vld [vmem:[#allocation5 + $0x20] sm:$0xff]
    %v44 = vld [vmem:[#allocation5 + $0x28] sm:$0xff]
    %v45 = vld [vmem:[#allocation5 + $0x30] sm:$0xff]
    %v46 = vld [vmem:[#allocation5 + $0x38] sm:$0xff]
    %v47 = vld [vmem:[#allocation5 + $0x40] sm:$0xff]
    %v48 = vld [vmem:[#allocation5 + $0x48] sm:$0xff]
    %v49 = vld [vmem:[#allocation5 + $0x50] sm:$0xff]
    %v50 = vld [vmem:[#allocation5 + $0x58] sm:$0xff]
    %v51 = vld [vmem:[#allocation5 + $0x60] sm:$0xff]
    %v52 = vld [vmem:[#allocation5 + $0x68] sm:$0xff]
    %v53 = vld [vmem:[#allocation5 + $0x70] sm:$0xff]
    %v54 = vld [vmem:[#allocation5 + $0x78] sm:$0xff]
    %v55 = vld [vmem:[#allocation5 + $0x80] sm:$0xff]
    %v56 = vld [vmem:[#allocation5 + $0x88] sm:$0xff]
    %v57 = vld [vmem:[#allocation5 + $0x90] sm:$0xff]
    %v58 = vld [vmem:[#allocation5 + $0x98] sm:$0xff]
    %v59 = vld [vmem:[#allocation5 + $0xa0] sm:$0xff]
    %v60 = vld [vmem:[#allocation5 + $0xa8] sm:$0xff]
    %v61 = vld [vmem:[#allocation5 + $0xb0] sm:$0xff]
    %v62 = vld [vmem:[#allocation5 + $0xb8] sm:$0xff]
    %v63 = vld [vmem:[#allocation5 + $0xc0] sm:$0xff]
    %v64 = vld [vmem:[#allocation5 + $0xc8] sm:$0xff]
    %v65 = vld [vmem:[#allocation5 + $0xd0] sm:$0xff]
    %v66 = vld [vmem:[#allocation5 + $0xd8] sm:$0xff]
    %v67 = vld [vmem:[#allocation5 + $0xe0] sm:$0xff]
    %v68 = vld [vmem:[#allocation5 + $0xe8] sm:$0xff]
    %v69 = vld [vmem:[#allocation5 + $0xf0] sm:$0xff]
    %v70 = vld [vmem:[#allocation5 + $0xf8] sm:$0xff]
    %v71 = vld [vmem:[#allocation5 + $0x100] sm:$0xff]
    %v72 = vld [vmem:[#allocation5 + $0x108] sm:$0xff]
    %v73 = vld [vmem:[#allocation5 + $0x110] sm:$0xff]
    %v74 = vld [vmem:[#allocation5 + $0x118] sm:$0xff]
    %v75 = vld [vmem:[#allocation5 + $0x120] sm:$0xff]
    %v76 = vld [vmem:[#allocation5 + $0x128] sm:$0xff]
    %v77 = vld [vmem:[#allocation5 + $0x130] sm:$0xff]
    %v78 = vld [vmem:[#allocation5 + $0x138] sm:$0xff]
    %v79 = vld [vmem:[#allocation5 + $0x140] sm:$0xff]
    %v80 = vld [vmem:[#allocation5 + $0x148] sm:$0xff]
    %v81 = vld [vmem:[#allocation5 + $0x150] sm:$0xff]
    %v82 = vld [vmem:[#allocation5 + $0x158] sm:$0xff]
    %v83 = vld [vmem:[#allocation5 + $0x160] sm:$0xff]
    %v84 = vld [vmem:[#allocation5 + $0x168] sm:$0xff]
    %v85 = vld [vmem:[#allocation5 + $0x170] sm:$0xff]
    %v86 = vld [vmem:[#allocation5 + $0x178] sm:$0xff]
    %v87 = vld [vmem:[#allocation5 + $0x180] sm:$0xff]
    %v88 = vld [vmem:[#allocation5 + $0x188] sm:$0xff]
    %v89 = vld [vmem:[#allocation5 + $0x190] sm:$0xff]
    %v90 = vld [vmem:[#allocation5 + $0x198] sm:$0xff]
    %v91 = vld [vmem:[#allocation5 + $0x1a0] sm:$0xff]
    %v92 = vld [vmem:[#allocation5 + $0x1a8] sm:$0xff]
    %v93 = vld [vmem:[#allocation5 + $0x1b0] sm:$0xff]
    %v94 = vld [vmem:[#allocation5 + $0x1b8] sm:$0xff]
    %v95 = vld [vmem:[#allocation5 + $0x1c0] sm:$0xff]
    %v96 = vld [vmem:[#allocation5 + $0x1c8] sm:$0xff]
    %v97 = vld [vmem:[#allocation5 + $0x1d0] sm:$0xff]
    %v98 = vld [vmem:[#allocation5 + $0x1d8] sm:$0xff]
    %v99 = vld [vmem:[#allocation5 + $0x1e0] sm:$0xff]
    %v100 = vld [vmem:[#allocation5 + $0x1e8] sm:$0xff]
    %v101 = vld [vmem:[#allocation5 + $0x1f0] sm:$0xff]
    %v102 = vld [vmem:[#allocation5 + $0x1f8] sm:$0xff]
    %v103 = vlaneseq
    %v104 = vand.u32 %v103, 127
    %105 = vset.pattern.permute.xlu0 0
    %106 = vperm.xlu0 %105, %v38
    %v107 = vpop.permute.xlu0 %106
    %vm108 = vcmp.eq.s32.totalorder %v107, %v104
    %109 = vset.pattern.permute.xlu0 1
    %110 = vperm.xlu0 %109, %v38
    %v111 = vpop.permute.xlu0 %110
    %vm112 = vcmp.eq.s32.totalorder %v111, %v104
    %vm113 = vmor %vm108, %vm112
    %114 = vset.pattern.permute.xlu0 2
    %115 = vperm.xlu0 %114, %v38
    %v116 = vpop.permute.xlu0 %115
    %vm117 = vcmp.eq.s32.totalorder %v116, %v104
    %vm118 = vmor %vm113, %vm117
    %119 = vset.pattern.permute.xlu0 3
    %120 = vperm.xlu0 %119, %v38
    %v121 = vpop.permute.xlu0 %120
    %vm122 = vcmp.eq.s32.totalorder %v121, %v104
    %vm123 = vmor %vm118, %vm122
    %v124 = vsel %vm123, 1, 0
    %v125 = vcvt.s32.f32 %v124
    %126 = vset.pattern.permute.xlu0 4
    %127 = vperm.xlu0 %126, %v38
    %v128 = vpop.permute.xlu0 %127
    %vm129 = vcmp.eq.s32.totalorder %v128, %v104
    %130 = vset.pattern.permute.xlu0 5
    %131 = vperm.xlu0 %130, %v38
    %v132 = vpop.permute.xlu0 %131
    %vm133 = vcmp.eq.s32.totalorder %v132, %v104
    %vm134 = vmor %vm129, %vm133
    %135 = vset.pattern.permute.xlu0 6
    %136 = vperm.xlu0 %135, %v38
    %v137 = vpop.permute.xlu0 %136
    %vm138 = vcmp.eq.s32.totalorder %v137, %v104
    %vm139 = vmor %vm134, %vm138
    %140 = vset.pattern.permute.xlu0 7
    %141 = vperm.xlu0 %140, %v38
    %v142 = vpop.permute.xlu0 %141
    %vm143 = vcmp.eq.s32.totalorder %v142, %v104
    %vm144 = vmor %vm139, %vm143
    %v145 = vsel %vm144, 1, 0
    %v146 = vcvt.s32.f32 %v145
    %147 = vset.pattern.permute.xlu0 8
    %148 = vperm.xlu0 %147, %v38
    %v149 = vpop.permute.xlu0 %148
    %vm150 = vcmp.eq.s32.totalorder %v149, %v104
    %151 = vset.pattern.permute.xlu0 9
    %152 = vperm.xlu0 %151, %v38
    %v153 = vpop.permute.xlu0 %152
    %vm154 = vcmp.eq.s32.totalorder %v153, %v104
    %vm155 = vmor %vm150, %vm154
    %156 = vset.pattern.permute.xlu0 10
    %157 = vperm.xlu0 %156, %v38
    %v158 = vpop.permute.xlu0 %157
    %vm159 = vcmp.eq.s32.totalorder %v158, %v104
    %vm160 = vmor %vm155, %vm159
    %161 = vset.pattern.permute.xlu0 11
    %162 = vperm.xlu0 %161, %v38
    %v163 = vpop.permute.xlu0 %162
    %vm164 = vcmp.eq.s32.totalorder %v163, %v104
    %vm165 = vmor %vm160, %vm164
    %v166 = vsel %vm165, 1, 0
    %v167 = vcvt.s32.f32 %v166
    %168 = vset.pattern.permute.xlu0 12
    %169 = vperm.xlu0 %168, %v38
    %v170 = vpop.permute.xlu0 %169
    %vm171 = vcmp.eq.s32.totalorder %v170, %v104
    %172 = vset.pattern.permute.xlu0 13
    %173 = vperm.xlu0 %172, %v38
    %v174 = vpop.permute.xlu0 %173
    %vm175 = vcmp.eq.s32.totalorder %v174, %v104
    %vm176 = vmor %vm171, %vm175
    %177 = vset.pattern.permute.xlu0 14
    %178 = vperm.xlu0 %177, %v38
    %v179 = vpop.permute.xlu0 %178
    %vm180 = vcmp.eq.s32.totalorder %v179, %v104
    %vm181 = vmor %vm176, %vm180
    %182 = vset.pattern.permute.xlu0 15
    %183 = vperm.xlu0 %182, %v38
    %v184 = vpop.permute.xlu0 %183
    %vm185 = vcmp.eq.s32.totalorder %v184, %v104
    %vm186 = vmor %vm181, %vm185
    %v187 = vsel %vm186, 1, 0
    %v188 = vcvt.s32.f32 %v187
    %189 = vmatprep.subr.mxu0 0.0
    %190 = vmatpush1.msra.mxu0 %v39
    %191 = vmatprep.subr.mxu0 0.0
    %192 = vmatpush1.msra.mxu0 %v40
    %193 = vmatprep.subr.mxu0 0.0
    %194 = vmatpush1.msra.mxu0 %v41
    %195 = vmatprep.subr.mxu0 0.0
    %196 = vmatpush1.msra.mxu0 %v42
    %197 = vmatprep.subr.mxu0 0.0
    %198 = vmatpush1.msra.mxu0 %v43
    %199 = vmatprep.subr.mxu0 0.0
    %200 = vmatpush1.msra.mxu0 %v44
    %201 = vmatprep.subr.mxu0 0.0
    %202 = vmatpush1.msra.mxu0 %v45
    %203 = vmatprep.subr.mxu0 0.0
    %204 = vmatpush1.msra.mxu0 %v46
    %205 = vmatprep.subr.mxu0 0.0
    %206 = vmatpush1.msra.mxu0 %v47
    %207 = vmatprep.subr.mxu0 0.0
    %208 = vmatpush1.msra.mxu0 %v48
    %209 = vmatprep.subr.mxu0 0.0
    %210 = vmatpush1.msra.mxu0 %v49
    %211 = vmatprep.subr.mxu0 0.0
    %212 = vmatpush1.msra.mxu0 %v50
    %213 = vmatprep.subr.mxu0 0.0
    %214 = vmatpush1.msra.mxu0 %v51
    %215 = vmatprep.subr.mxu0 0.0
    %216 = vmatpush1.msra.mxu0 %v52
    %217 = vmatprep.subr.mxu0 0.0
    %218 = vmatpush1.msra.mxu0 %v53
    %219 = vmatprep.subr.mxu0 0.0
    %220 = vmatpush1.msra.mxu0 %v54
    %221 = vmatprep.subr.mxu0 0.0
    %222 = vmatpush1.msra.mxu0 %v55
    %223 = vmatprep.subr.mxu0 0.0
    %224 = vmatpush1.msra.mxu0 %v56
    %225 = vmatprep.subr.mxu0 0.0
    %226 = vmatpush1.msra.mxu0 %v57
    %227 = vmatprep.subr.mxu0 0.0
    %228 = vmatpush1.msra.mxu0 %v58
    %229 = vmatprep.subr.mxu0 0.0
    %230 = vmatpush1.msra.mxu0 %v59
    %231 = vmatprep.subr.mxu0 0.0
    %232 = vmatpush1.msra.mxu0 %v60
    %233 = vmatprep.subr.mxu0 0.0
    %234 = vmatpush1.msra.mxu0 %v61
    %235 = vmatprep.subr.mxu0 0.0
    %236 = vmatpush1.msra.mxu0 %v62
    %237 = vmatprep.subr.mxu0 0.0
    %238 = vmatpush1.msra.mxu0 %v63
    %239 = vmatprep.subr.mxu0 0.0
    %240 = vmatpush1.msra.mxu0 %v64
    %241 = vmatprep.subr.mxu0 0.0
    %242 = vmatpush1.msra.mxu0 %v65
    %243 = vmatprep.subr.mxu0 0.0
    %244 = vmatpush1.msra.mxu0 %v66
    %245 = vmatprep.subr.mxu0 0.0
    %246 = vmatpush1.msra.mxu0 %v67
    %247 = vmatprep.subr.mxu0 0.0
    %248 = vmatpush1.msra.mxu0 %v68
    %249 = vmatprep.subr.mxu0 0.0
    %250 = vmatpush1.msra.mxu0 %v69
    %251 = vmatprep.subr.mxu0 0.0
    %252 = vmatpush1.msra.mxu0 %v70
    %253 = vmatprep.mubr.f32.mxu0 %v146
    %254 = vmatmul.mubr.f32.gmra.mrb[0].mxu0 %v125
    %v255 = vpop.f32.mrb[0].mxu0
    %v256 = vadd.f32 0.0, %v255
    %v257 = vpop.f32.mrb[0].mxu0
    %258 = vdwg.mxu0
    %259 = vmatprep.subr.mxu0 0.0
    %260 = vmatpush1.msra.mxu0 %v71
    %261 = vmatprep.subr.mxu0 0.0
    %262 = vmatpush1.msra.mxu0 %v72
    %263 = vmatprep.subr.mxu0 0.0
    %264 = vmatpush1.msra.mxu0 %v73
    %265 = vmatprep.subr.mxu0 0.0
    %266 = vmatpush1.msra.mxu0 %v74
    %267 = vmatprep.subr.mxu0 0.0
    %268 = vmatpush1.msra.mxu0 %v75
    %269 = vmatprep.subr.mxu0 0.0
    %270 = vmatpush1.msra.mxu0 %v76
    %271 = vmatprep.subr.mxu0 0.0
    %272 = vmatpush1.msra.mxu0 %v77
    %273 = vmatprep.subr.mxu0 0.0
    %274 = vmatpush1.msra.mxu0 %v78
    %275 = vmatprep.subr.mxu0 0.0
    %276 = vmatpush1.msra.mxu0 %v79
    %277 = vmatprep.subr.mxu0 0.0
    %278 = vmatpush1.msra.mxu0 %v80
    %279 = vmatprep.subr.mxu0 0.0
    %280 = vmatpush1.msra.mxu0 %v81
    %281 = vmatprep.subr.mxu0 0.0
    %282 = vmatpush1.msra.mxu0 %v82
    %283 = vmatprep.subr.mxu0 0.0
    %284 = vmatpush1.msra.mxu0 %v83
    %285 = vmatprep.subr.mxu0 0.0
    %286 = vmatpush1.msra.mxu0 %v84
    %287 = vmatprep.subr.mxu0 0.0
    %288 = vmatpush1.msra.mxu0 %v85
    %289 = vmatprep.subr.mxu0 0.0
    %290 = vmatpush1.msra.mxu0 %v86
    %291 = vmatprep.subr.mxu0 0.0
    %292 = vmatpush1.msra.mxu0 %v87
    %293 = vmatprep.subr.mxu0 0.0
    %294 = vmatpush1.msra.mxu0 %v88
    %295 = vmatprep.subr.mxu0 0.0
    %296 = vmatpush1.msra.mxu0 %v89
    %297 = vmatprep.subr.mxu0 0.0
    %298 = vmatpush1.msra.mxu0 %v90
    %299 = vmatprep.subr.mxu0 0.0
    %300 = vmatpush1.msra.mxu0 %v91
    %301 = vmatprep.subr.mxu0 0.0
    %302 = vmatpush1.msra.mxu0 %v92
    %303 = vmatprep.subr.mxu0 0.0
    %304 = vmatpush1.msra.mxu0 %v93
    %305 = vmatprep.subr.mxu0 0.0
    %306 = vmatpush1.msra.mxu0 %v94
    %307 = vmatprep.subr.mxu0 0.0
    %308 = vmatpush1.msra.mxu0 %v95
    %309 = vmatprep.subr.mxu0 0.0
    %310 = vmatpush1.msra.mxu0 %v96
    %311 = vmatprep.subr.mxu0 0.0
    %312 = vmatpush1.msra.mxu0 %v97
    %313 = vmatprep.subr.mxu0 0.0
    %314 = vmatpush1.msra.mxu0 %v98
    %315 = vmatprep.subr.mxu0 0.0
    %316 = vmatpush1.msra.mxu0 %v99
    %317 = vmatprep.subr.mxu0 0.0
    %318 = vmatpush1.msra.mxu0 %v100
    %319 = vmatprep.subr.mxu0 0.0
    %320 = vmatpush1.msra.mxu0 %v101
    %321 = vmatprep.subr.mxu0 0.0
    %322 = vmatpush1.msra.mxu0 %v102
    %323 = vmatprep.mubr.f32.mxu0 %v188
    %324 = vmatmul.mubr.f32.gmra.mrb[0].mxu0 %v167
    %v325 = vpop.f32.mrb[0].mxu0
    %v326 = vadd.f32 %v256, %v325
    %v327 = vpop.f32.mrb[0].mxu0
    %328 = vdwg.mxu0
    %329 = vst [vmem:[#allocation7] sm:$0xff] %v326
    // Predicated region
    $region18: #{tpu_custom_call.1} parent=1 // pred_check
      _
    $region19: #{tpu_custom_call.1} parent=1 // pred_check_branch
      %331 = sbr.rel (0) target = $region21
    $region20: #{tpu_custom_call.1} parent=1 // pred_region
      %s333 = ssub.s32 128, 128
      %334 = vsyncadd [#allocation4], %s333
      %s336 = sshll.u32 [#allocation7], 4
      %s337 = int_to_ptr.vmem [resolvable:$true] %s336
      %339 = dma.vmem_to_hbm [thread:$0]  %s337, 128, %s2, [#allocation4]
    $region21: #{tpu_custom_call.1} parent=1 // pred_fallthru
      _
    // Predicated region
    $region22: #{tpu_custom_call.1} parent=1 // pred_check
      _
    $region23: #{tpu_custom_call.1} parent=1 // pred_check_branch
      %341 = sbr.rel (0) target = $region25
    $region24: #{tpu_custom_call.1} parent=1 // pred_region
      %342 = dma.done [#allocation4], 128
    $region25: #{tpu_custom_call.1} parent=1 // pred_fallthru
      _
    %343 = vsyncpa [#allocation3], 1
    %344 = vsyncpa [#allocation6], 1
    %345 = vsyncpa [#allocation4], 1

// kernel: tpu_custom_call.1
$region0: #{tpu_custom_call.1}
  #allocation0 [shape = 'u32[]', space=smem, size = 0x4, offset = 0x4, fixed_abs, tag = 'smem constant byte address 0x4 - core index']
  #allocation1 [shape = 'u32[144,128]{1,0:T(1,128)}', space=vmem, size = 0x12000, scoped, tag = 'internal scratch']
  %s0 = inlined_call_operand.hbm [shape: s32[8,16], index: 0, kind: input, shape index: {}]
  %s1 = inlined_call_operand.hbm [shape: f32[512,128], index: 1, kind: input, shape index: {}]
  %s2 = inlined_call_operand.hbm [shape: f32[8,128], index: 2, kind: output, shape index: {}]
  %s3 = sld [smem:[#allocation0]]
  $region26: #{tpu_custom_call.1} parent=0
    _
  %s5 = ssub.s32 1, %s3
  %s6 = scalar_select 0, %s5, %s3
  $region1: #{tpu_custom_call.1} parent=0
    #allocation2 [shape = 'u8[4096]{0}', space=vmem, size = 0x1000, scoped, tag = 'input window, operand 0, single buffered']
    #allocation3 [shape = 's32[1]{0}', space=sflag, size = 0x4, scoped, tag = 'scoped memory for tpu_custom_call.1']
    #allocation4 [shape = 's32[1]{0}', space=sflag, size = 0x4, scoped, tag = 'scoped memory for tpu_custom_call.1']
    #allocation5 [shape = 'u8[262144]{0}', space=vmem, size = 0x40000, scoped, tag = 'input window, operand 1, single buffered']
    #allocation6 [shape = 's32[1]{0}', space=sflag, size = 0x4, scoped, tag = 'scoped memory for tpu_custom_call.1']
    #allocation7 [shape = 'u8[4096]{0}', space=vmem, size = 0x1000, scoped, tag = 'output window, operand 0, single buffered']
    %7 = vsyncpa [#allocation3], 0
    %8 = vsyncpa [#allocation6], 0
    %9 = vsyncpa [#allocation4], 0
    // Predicated region
    $region2: #{tpu_custom_call.1} parent=1 // pred_check
      _
    $region3: #{tpu_custom_call.1} parent=1 // pred_check_branch
      %11 = sbr.rel (0) target = $region5
    $region4: #{tpu_custom_call.1} parent=1 // pred_region
      %s13 = ssub.s32 128, 128
      %14 = vsyncadd [#allocation3], %s13
      %s16 = sshll.u32 [#allocation2], 4
      %s17 = int_to_ptr.vmem [resolvable:$true] %s16
      %19 = dma.hbm_to_vmem [thread:$0]  %s0, 128, %s17, [#allocation3]
    $region5: #{tpu_custom_call.1} parent=1 // pred_fallthru
      _
    // Predicated region
    $region6: #{tpu_custom_call.1} parent=1 // pred_check
      _
    $region7: #{tpu_custom_call.1} parent=1 // pred_check_branch
      %21 = sbr.rel (0) target = $region9
    $region8: #{tpu_custom_call.1} parent=1 // pred_region
      %s23 = ssub.s32 8192, 8192
      %24 = vsyncadd [#allocation6], %s23
      %s25 = sshll.u32 [#allocation5], 4
      %s26 = int_to_ptr.vmem [resolvable:$true] %s25
      %31 = dma.hbm_to_vmem [thread:$0]  %s1, 8192, %s26, [#allocation6], 128, 128, 8
    $region9: #{tpu_custom_call.1} parent=1 // pred_fallthru
      _
    // Predicated region
    $region10: #{tpu_custom_call.1} parent=1 // pred_check
      _
    $region11: #{tpu_custom_call.1} parent=1 // pred_check_branch
      %33 = sbr.rel (0) target = $region13
    $region12: #{tpu_custom_call.1} parent=1 // pred_region
      %34 = dma.done [#allocation3], 128
    $region13: #{tpu_custom_call.1} parent=1 // pred_fallthru
      _
    // Predicated region
    $region14: #{tpu_custom_call.1} parent=1 // pred_check
      _
    $region15: #{tpu_custom_call.1} parent=1 // pred_check_branch
      %36 = sbr.rel (0) target = $region17
    $region16: #{tpu_custom_call.1} parent=1 // pred_region
      %37 = dma.done [#allocation6], 8192
    $region17: #{tpu_custom_call.1} parent=1 // pred_fallthru
      _
    %v38 = vld [vmem:[#allocation2] sm:$0xff]
    %v39 = vld [vmem:[#allocation5] sm:$0xff]
    %v40 = vld [vmem:[#allocation5 + $0x8] sm:$0xff]
    %v41 = vld [vmem:[#allocation5 + $0x10] sm:$0xff]
    %v42 = vld [vmem:[#allocation5 + $0x18] sm:$0xff]
    %v43 = vld [vmem:[#allocation5 + $0x20] sm:$0xff]
    %v44 = vld [vmem:[#allocation5 + $0x28] sm:$0xff]
    %v45 = vld [vmem:[#allocation5 + $0x30] sm:$0xff]
    %v46 = vld [vmem:[#allocation5 + $0x38] sm:$0xff]
    %v47 = vld [vmem:[#allocation5 + $0x40] sm:$0xff]
    %v48 = vld [vmem:[#allocation5 + $0x48] sm:$0xff]
    %v49 = vld [vmem:[#allocation5 + $0x50] sm:$0xff]
    %v50 = vld [vmem:[#allocation5 + $0x58] sm:$0xff]
    %v51 = vld [vmem:[#allocation5 + $0x60] sm:$0xff]
    %v52 = vld [vmem:[#allocation5 + $0x68] sm:$0xff]
    %v53 = vld [vmem:[#allocation5 + $0x70] sm:$0xff]
    %v54 = vld [vmem:[#allocation5 + $0x78] sm:$0xff]
    %v55 = vld [vmem:[#allocation5 + $0x80] sm:$0xff]
    %v56 = vld [vmem:[#allocation5 + $0x88] sm:$0xff]
    %v57 = vld [vmem:[#allocation5 + $0x90] sm:$0xff]
    %v58 = vld [vmem:[#allocation5 + $0x98] sm:$0xff]
    %v59 = vld [vmem:[#allocation5 + $0xa0] sm:$0xff]
    %v60 = vld [vmem:[#allocation5 + $0xa8] sm:$0xff]
    %v61 = vld [vmem:[#allocation5 + $0xb0] sm:$0xff]
    %v62 = vld [vmem:[#allocation5 + $0xb8] sm:$0xff]
    %v63 = vld [vmem:[#allocation5 + $0xc0] sm:$0xff]
    %v64 = vld [vmem:[#allocation5 + $0xc8] sm:$0xff]
    %v65 = vld [vmem:[#allocation5 + $0xd0] sm:$0xff]
    %v66 = vld [vmem:[#allocation5 + $0xd8] sm:$0xff]
    %v67 = vld [vmem:[#allocation5 + $0xe0] sm:$0xff]
    %v68 = vld [vmem:[#allocation5 + $0xe8] sm:$0xff]
    %v69 = vld [vmem:[#allocation5 + $0xf0] sm:$0xff]
    %v70 = vld [vmem:[#allocation5 + $0xf8] sm:$0xff]
    %v71 = vld [vmem:[#allocation5 + $0x100] sm:$0xff]
    %v72 = vld [vmem:[#allocation5 + $0x108] sm:$0xff]
    %v73 = vld [vmem:[#allocation5 + $0x110] sm:$0xff]
    %v74 = vld [vmem:[#allocation5 + $0x118] sm:$0xff]
    %v75 = vld [vmem:[#allocation5 + $0x120] sm:$0xff]
    %v76 = vld [vmem:[#allocation5 + $0x128] sm:$0xff]
    %v77 = vld [vmem:[#allocation5 + $0x130] sm:$0xff]
    %v78 = vld [vmem:[#allocation5 + $0x138] sm:$0xff]
    %v79 = vld [vmem:[#allocation5 + $0x140] sm:$0xff]
    %v80 = vld [vmem:[#allocation5 + $0x148] sm:$0xff]
    %v81 = vld [vmem:[#allocation5 + $0x150] sm:$0xff]
    %v82 = vld [vmem:[#allocation5 + $0x158] sm:$0xff]
    %v83 = vld [vmem:[#allocation5 + $0x160] sm:$0xff]
    %v84 = vld [vmem:[#allocation5 + $0x168] sm:$0xff]
    %v85 = vld [vmem:[#allocation5 + $0x170] sm:$0xff]
    %v86 = vld [vmem:[#allocation5 + $0x178] sm:$0xff]
    %v87 = vld [vmem:[#allocation5 + $0x180] sm:$0xff]
    %v88 = vld [vmem:[#allocation5 + $0x188] sm:$0xff]
    %v89 = vld [vmem:[#allocation5 + $0x190] sm:$0xff]
    %v90 = vld [vmem:[#allocation5 + $0x198] sm:$0xff]
    %v91 = vld [vmem:[#allocation5 + $0x1a0] sm:$0xff]
    %v92 = vld [vmem:[#allocation5 + $0x1a8] sm:$0xff]
    %v93 = vld [vmem:[#allocation5 + $0x1b0] sm:$0xff]
    %v94 = vld [vmem:[#allocation5 + $0x1b8] sm:$0xff]
    %v95 = vld [vmem:[#allocation5 + $0x1c0] sm:$0xff]
    %v96 = vld [vmem:[#allocation5 + $0x1c8] sm:$0xff]
    %v97 = vld [vmem:[#allocation5 + $0x1d0] sm:$0xff]
    %v98 = vld [vmem:[#allocation5 + $0x1d8] sm:$0xff]
    %v99 = vld [vmem:[#allocation5 + $0x1e0] sm:$0xff]
    %v100 = vld [vmem:[#allocation5 + $0x1e8] sm:$0xff]
    %v101 = vld [vmem:[#allocation5 + $0x1f0] sm:$0xff]
    %v102 = vld [vmem:[#allocation5 + $0x1f8] sm:$0xff]
    %v103 = vlaneseq
    %v104 = vand.u32 %v103, 127
    %105 = vset.pattern.permute.xlu0 0
    %106 = vperm.xlu0 %105, %v38
    %v107 = vpop.permute.xlu0 %106
    %vm108 = vcmp.eq.s32.totalorder %v107, %v104
    %109 = vset.pattern.permute.xlu0 1
    %110 = vperm.xlu0 %109, %v38
    %v111 = vpop.permute.xlu0 %110
    %vm112 = vcmp.eq.s32.totalorder %v111, %v104
    %vm113 = vmor %vm108, %vm112
    %114 = vset.pattern.permute.xlu0 2
    %115 = vperm.xlu0 %114, %v38
    %v116 = vpop.permute.xlu0 %115
    %vm117 = vcmp.eq.s32.totalorder %v116, %v104
    %vm118 = vmor %vm113, %vm117
    %119 = vset.pattern.permute.xlu0 3
    %120 = vperm.xlu0 %119, %v38
    %v121 = vpop.permute.xlu0 %120
    %vm122 = vcmp.eq.s32.totalorder %v121, %v104
    %vm123 = vmor %vm118, %vm122
    %v124 = vsel %vm123, 1, 0
    %v125 = vcvt.s32.f32 %v124
    %126 = vset.pattern.permute.xlu0 4
    %127 = vperm.xlu0 %126, %v38
    %v128 = vpop.permute.xlu0 %127
    %vm129 = vcmp.eq.s32.totalorder %v128, %v104
    %130 = vset.pattern.permute.xlu0 5
    %131 = vperm.xlu0 %130, %v38
    %v132 = vpop.permute.xlu0 %131
    %vm133 = vcmp.eq.s32.totalorder %v132, %v104
    %vm134 = vmor %vm129, %vm133
    %135 = vset.pattern.permute.xlu0 6
    %136 = vperm.xlu0 %135, %v38
    %v137 = vpop.permute.xlu0 %136
    %vm138 = vcmp.eq.s32.totalorder %v137, %v104
    %vm139 = vmor %vm134, %vm138
    %140 = vset.pattern.permute.xlu0 7
    %141 = vperm.xlu0 %140, %v38
    %v142 = vpop.permute.xlu0 %141
    %vm143 = vcmp.eq.s32.totalorder %v142, %v104
    %vm144 = vmor %vm139, %vm143
    %v145 = vsel %vm144, 1, 0
    %v146 = vcvt.s32.f32 %v145
    %147 = vset.pattern.permute.xlu0 8
    %148 = vperm.xlu0 %147, %v38
    %v149 = vpop.permute.xlu0 %148
    %vm150 = vcmp.eq.s32.totalorder %v149, %v104
    %151 = vset.pattern.permute.xlu0 9
    %152 = vperm.xlu0 %151, %v38
    %v153 = vpop.permute.xlu0 %152
    %vm154 = vcmp.eq.s32.totalorder %v153, %v104
    %vm155 = vmor %vm150, %vm154
    %156 = vset.pattern.permute.xlu0 10
    %157 = vperm.xlu0 %156, %v38
    %v158 = vpop.permute.xlu0 %157
    %vm159 = vcmp.eq.s32.totalorder %v158, %v104
    %vm160 = vmor %vm155, %vm159
    %161 = vset.pattern.permute.xlu0 11
    %162 = vperm.xlu0 %161, %v38
    %v163 = vpop.permute.xlu0 %162
    %vm164 = vcmp.eq.s32.totalorder %v163, %v104
    %vm165 = vmor %vm160, %vm164
    %v166 = vsel %vm165, 1, 0
    %v167 = vcvt.s32.f32 %v166
    %168 = vset.pattern.permute.xlu0 12
    %169 = vperm.xlu0 %168, %v38
    %v170 = vpop.permute.xlu0 %169
    %vm171 = vcmp.eq.s32.totalorder %v170, %v104
    %172 = vset.pattern.permute.xlu0 13
    %173 = vperm.xlu0 %172, %v38
    %v174 = vpop.permute.xlu0 %173
    %vm175 = vcmp.eq.s32.totalorder %v174, %v104
    %vm176 = vmor %vm171, %vm175
    %177 = vset.pattern.permute.xlu0 14
    %178 = vperm.xlu0 %177, %v38
    %v179 = vpop.permute.xlu0 %178
    %vm180 = vcmp.eq.s32.totalorder %v179, %v104
    %vm181 = vmor %vm176, %vm180
    %182 = vset.pattern.permute.xlu0 15
    %183 = vperm.xlu0 %182, %v38
    %v184 = vpop.permute.xlu0 %183
    %vm185 = vcmp.eq.s32.totalorder %v184, %v104
    %vm186 = vmor %vm181, %vm185
    %v187 = vsel %vm186, 1, 0
    %v188 = vcvt.s32.f32 %v187
    %189 = vmatprep.subr.mxu0 0.0
    %190 = vmatpush1.msra.mxu0 %v39
    %191 = vmatprep.subr.mxu0 0.0
    %192 = vmatpush1.msra.mxu0 %v40
    %193 = vmatprep.subr.mxu0 0.0
    %194 = vmatpush1.msra.mxu0 %v41
    %195 = vmatprep.subr.mxu0 0.0
    %196 = vmatpush1.msra.mxu0 %v42
    %197 = vmatprep.subr.mxu0 0.0
    %198 = vmatpush1.msra.mxu0 %v43
    %199 = vmatprep.subr.mxu0 0.0
    %200 = vmatpush1.msra.mxu0 %v44
    %201 = vmatprep.subr.mxu0 0.0
    %202 = vmatpush1.msra.mxu0 %v45
    %203 = vmatprep.subr.mxu0 0.0
    %204 = vmatpush1.msra.mxu0 %v46
    %205 = vmatprep.subr.mxu0 0.0
    %206 = vmatpush1.msra.mxu0 %v47
    %207 = vmatprep.subr.mxu0 0.0
    %208 = vmatpush1.msra.mxu0 %v48
    %209 = vmatprep.subr.mxu0 0.0
    %210 = vmatpush1.msra.mxu0 %v49
    %211 = vmatprep.subr.mxu0 0.0
    %212 = vmatpush1.msra.mxu0 %v50
    %213 = vmatprep.subr.mxu0 0.0
    %214 = vmatpush1.msra.mxu0 %v51
    %215 = vmatprep.subr.mxu0 0.0
    %216 = vmatpush1.msra.mxu0 %v52
    %217 = vmatprep.subr.mxu0 0.0
    %218 = vmatpush1.msra.mxu0 %v53
    %219 = vmatprep.subr.mxu0 0.0
    %220 = vmatpush1.msra.mxu0 %v54
    %221 = vmatprep.subr.mxu0 0.0
    %222 = vmatpush1.msra.mxu0 %v55
    %223 = vmatprep.subr.mxu0 0.0
    %224 = vmatpush1.msra.mxu0 %v56
    %225 = vmatprep.subr.mxu0 0.0
    %226 = vmatpush1.msra.mxu0 %v57
    %227 = vmatprep.subr.mxu0 0.0
    %228 = vmatpush1.msra.mxu0 %v58
    %229 = vmatprep.subr.mxu0 0.0
    %230 = vmatpush1.msra.mxu0 %v59
    %231 = vmatprep.subr.mxu0 0.0
    %232 = vmatpush1.msra.mxu0 %v60
    %233 = vmatprep.subr.mxu0 0.0
    %234 = vmatpush1.msra.mxu0 %v61
    %235 = vmatprep.subr.mxu0 0.0
    %236 = vmatpush1.msra.mxu0 %v62
    %237 = vmatprep.subr.mxu0 0.0
    %238 = vmatpush1.msra.mxu0 %v63
    %239 = vmatprep.subr.mxu0 0.0
    %240 = vmatpush1.msra.mxu0 %v64
    %241 = vmatprep.subr.mxu0 0.0
    %242 = vmatpush1.msra.mxu0 %v65
    %243 = vmatprep.subr.mxu0 0.0
    %244 = vmatpush1.msra.mxu0 %v66
    %245 = vmatprep.subr.mxu0 0.0
    %246 = vmatpush1.msra.mxu0 %v67
    %247 = vmatprep.subr.mxu0 0.0
    %248 = vmatpush1.msra.mxu0 %v68
    %249 = vmatprep.subr.mxu0 0.0
    %250 = vmatpush1.msra.mxu0 %v69
    %251 = vmatprep.subr.mxu0 0.0
    %252 = vmatpush1.msra.mxu0 %v70
    %253 = vmatprep.mubr.f32.mxu0 %v146
    %254 = vmatmul.mubr.f32.gmra.mrb[0].mxu0 %v125
    %v255 = vpop.f32.mrb[0].mxu0
    %v256 = vadd.f32 0.0, %v255
    %v257 = vpop.f32.mrb[0].mxu0
    %258 = vdwg.mxu0
    %259 = vmatprep.subr.mxu0 0.0
    %260 = vmatpush1.msra.mxu0 %v71
    %261 = vmatprep.subr.mxu0 0.0
    %262 = vmatpush1.msra.mxu0 %v72
    %263 = vmatprep.subr.mxu0 0.0
    %264 = vmatpush1.msra.mxu0 %v73
    %265 = vmatprep.subr.mxu0 0.0
    %266 = vmatpush1.msra.mxu0 %v74
    %267 = vmatprep.subr.mxu0 0.0
    %268 = vmatpush1.msra.mxu0 %v75
    %269 = vmatprep.subr.mxu0 0.0
    %270 = vmatpush1.msra.mxu0 %v76
    %271 = vmatprep.subr.mxu0 0.0
    %272 = vmatpush1.msra.mxu0 %v77
    %273 = vmatprep.subr.mxu0 0.0
    %274 = vmatpush1.msra.mxu0 %v78
    %275 = vmatprep.subr.mxu0 0.0
    %276 = vmatpush1.msra.mxu0 %v79
    %277 = vmatprep.subr.mxu0 0.0
    %278 = vmatpush1.msra.mxu0 %v80
    %279 = vmatprep.subr.mxu0 0.0
    %280 = vmatpush1.msra.mxu0 %v81
    %281 = vmatprep.subr.mxu0 0.0
    %282 = vmatpush1.msra.mxu0 %v82
    %283 = vmatprep.subr.mxu0 0.0
    %284 = vmatpush1.msra.mxu0 %v83
    %285 = vmatprep.subr.mxu0 0.0
    %286 = vmatpush1.msra.mxu0 %v84
    %287 = vmatprep.subr.mxu0 0.0
    %288 = vmatpush1.msra.mxu0 %v85
    %289 = vmatprep.subr.mxu0 0.0
    %290 = vmatpush1.msra.mxu0 %v86
    %291 = vmatprep.subr.mxu0 0.0
    %292 = vmatpush1.msra.mxu0 %v87
    %293 = vmatprep.subr.mxu0 0.0
    %294 = vmatpush1.msra.mxu0 %v88
    %295 = vmatprep.subr.mxu0 0.0
    %296 = vmatpush1.msra.mxu0 %v89
    %297 = vmatprep.subr.mxu0 0.0
    %298 = vmatpush1.msra.mxu0 %v90
    %299 = vmatprep.subr.mxu0 0.0
    %300 = vmatpush1.msra.mxu0 %v91
    %301 = vmatprep.subr.mxu0 0.0
    %302 = vmatpush1.msra.mxu0 %v92
    %303 = vmatprep.subr.mxu0 0.0
    %304 = vmatpush1.msra.mxu0 %v93
    %305 = vmatprep.subr.mxu0 0.0
    %306 = vmatpush1.msra.mxu0 %v94
    %307 = vmatprep.subr.mxu0 0.0
    %308 = vmatpush1.msra.mxu0 %v95
    %309 = vmatprep.subr.mxu0 0.0
    %310 = vmatpush1.msra.mxu0 %v96
    %311 = vmatprep.subr.mxu0 0.0
    %312 = vmatpush1.msra.mxu0 %v97
    %313 = vmatprep.subr.mxu0 0.0
    %314 = vmatpush1.msra.mxu0 %v98
    %315 = vmatprep.subr.mxu0 0.0
    %316 = vmatpush1.msra.mxu0 %v99
    %317 = vmatprep.subr.mxu0 0.0
    %318 = vmatpush1.msra.mxu0 %v100
    %319 = vmatprep.subr.mxu0 0.0
    %320 = vmatpush1.msra.mxu0 %v101
    %321 = vmatprep.subr.mxu0 0.0
    %322 = vmatpush1.msra.mxu0 %v102
    %323 = vmatprep.mubr.f32.mxu0 %v188
    %324 = vmatmul.mubr.f32.gmra.mrb[0].mxu0 %v167
    %v325 = vpop.f32.mrb[0].mxu0
    %v326 = vadd.f32 %v256, %v325
    %v327 = vpop.f32.mrb[0].mxu0
    %328 = vdwg.mxu0
    %329 = vst [vmem:[#allocation7] sm:$0xff] %v326
    // Predicated region
    $region18: #{tpu_custom_call.1} parent=1 // pred_check
      _
    $region19: #{tpu_custom_call.1} parent=1 // pred_check_branch
      %331 = sbr.rel (0) target = $region21
    $region20: #{tpu_custom_call.1} parent=1 // pred_region
      %s333 = ssub.s32 128, 128
      %334 = vsyncadd [#allocation4], %s333
      %s336 = sshll.u32 [#allocation7], 4
      %s337 = int_to_ptr.vmem [resolvable:$true] %s336
      %339 = dma.vmem_to_hbm [thread:$0]  %s337, 128, %s2, [#allocation4]
    $region21: #{tpu_custom_call.1} parent=1 // pred_fallthru
      _
    // Predicated region
    $region22: #{tpu_custom_call.1} parent=1 // pred_check
      _
    $region23: #{tpu_custom_call.1} parent=1 // pred_check_branch
      %341 = sbr.rel (0) target = $region25
    $region24: #{tpu_custom_call.1} parent=1 // pred_region
      %342 = dma.done [#allocation4], 128
    $region25: #{tpu_custom_call.1} parent=1 // pred_fallthru
      _
    %343 = vsyncpa [#allocation3], 1
    %344 = vsyncpa [#allocation6], 1
    %345 = vsyncpa [#allocation4], 1

</llo_original>
